<compile_context>
chip_gen: v6e
topology: v6e:2x2x1
jax: 0.10.0
libtpu: 0.0.40
codegen_flags: <defaults>
</compile_context>

<pallas_src>
from typing import List

import jax
import jax.numpy as jnp
from jax.experimental import pallas as pl
from jax.experimental.pallas import tpu as pltpu


def _verify_feature_dim(feature_dims: List[int]):
    assert isinstance(feature_dims, list)
    assert all(x > 0 for x in feature_dims)


def _round_up(x: int, m: int) -> int:
    return ((x + m - 1) // m) * m


def _make_concat_kernel(feature_dims: List[int]):
    """Kernel with static per-input slice stores into the output block."""
    offsets = []
    off = 0
    for fd in feature_dims:
        offsets.append(off)
        off += fd

    def kernel(*refs):
        # refs = (in_ref_0, ..., in_ref_{n-1}, out_ref)
        out_ref = refs[-1]
        for i, (o, fd) in enumerate(zip(offsets, feature_dims)):
            out_ref[:, o:o + fd] = refs[i][...]

    return kernel


def _vmem_budget_and_limit():
    """Per-generation VMEM budget (for tile sizing) and compiler limit."""
    try:
        kind = jax.devices()[0].device_kind.lower()
    except Exception:  # pragma: no cover - defensive
        kind = ""
    # 128 MiB-VMEM parts (v4 / v5e / v5p / v6e) can afford bigger tiles.
    if any(tag in kind for tag in ("v4", "v5", "v6")):
        return 64 << 20, 80 << 20
    # v7x (64 MiB per TensorCore) and unknown parts: stay conservative.
    return 40 << 20, 48 << 20


def _row_tile(num_rows: int, feature_dims: List[int], out_dim: int,
              itemsize: int, vmem_budget: int) -> int:
    """Row-tile size: as big as the VMEM budget allows, pack-aligned, and
    leaving >= 8 grid steps (when rows permit) for cross-core sharding."""
    # Sublane packing: f32 -> 8 rows/vreg, bf16 -> 16, int8/fp8 -> 32.
    pack = {1: 32, 2: 16}.get(itemsize, 8)
    lane = 128
    # Lane-padded column count for inputs + output, double-buffered.
    padded_cols = sum(_round_up(fd, lane) for fd in feature_dims)
    padded_cols += _round_up(out_dim, lane)
    per_row_bytes = 2 * itemsize * padded_cols
    tr_cap = max(pack, vmem_budget // max(per_row_bytes, 1))

    # Keep at least ~8 grid steps when rows are large enough, so the
    # "parallel" axis can shard across TensorCores (v7x) without hurting
    # per-step DMA efficiency.
    min_steps = 8
    if num_rows >= min_steps * pack:
        tr_cap = min(tr_cap, max(pack, num_rows // min_steps))

    tr = min(num_rows, tr_cap)
    if tr < num_rows:
        # Must be a multiple of the sublane pack unless it spans the full axis.
        tr = max(pack, (tr // pack) * pack)
    return tr


class ConcatFusion:
    """JAX/Pallas equivalent of pytorchvideo ConcatFusion."""

    def __init__(self, feature_dims: List[int]):
        _verify_feature_dim(feature_dims)
        self._feature_dims = list(feature_dims)
        self._output_dim = sum(feature_dims)

    @property
    def output_dim(self):
        return self._output_dim

    def __call__(self, input_list: List[jax.Array]) -> jax.Array:
        assert len(input_list) == len(self._feature_dims)
        b, s, _ = input_list[0].shape
        dtype = input_list[0].dtype
        for x, fd in zip(input_list, self._feature_dims):
            assert x.shape == (b, s, fd), (x.shape, (b, s, fd))
            assert x.dtype == dtype

        out_dim = self._output_dim

        # Narrow-output fallback: with out_dim < 128 the output store is a
        # masked partial store and the Pallas path only adds overhead.
        if out_dim < 128:
            return jnp.concatenate(input_list, axis=-1)

        rows = b * s
        itemsize = jnp.dtype(dtype).itemsize

        # Flatten (batch, seq) -> rows.  Free for contiguous row-major arrays.
        flat_inputs = [
            x.reshape(rows, fd) for x, fd in zip(input_list, self._feature_dims)
        ]

        vmem_budget, vmem_limit = _vmem_budget_and_limit()
        tr = _row_tile(rows, self._feature_dims, out_dim, itemsize, vmem_budget)
        grid = (pl.cdiv(rows, tr),)

        # Last dim of every block equals the full array feature dim, and the
        # row tile is either pack-aligned or the full row extent, so the
        # (8, 128) block rule is satisfied.  Uneven last row-blocks are
        # handled by Pallas (OOB output rows are not written back).
        in_specs = [
            pl.BlockSpec((tr, fd), lambda i: (i, 0)) for fd in self._feature_dims
        ]
        out_spec = pl.BlockSpec((tr, out_dim), lambda i: (i, 0))

        out_flat = pl.pallas_call(
            _make_concat_kernel(self._feature_dims),
            out_shape=jax.ShapeDtypeStruct((rows, out_dim), dtype),
            grid=grid,
            in_specs=in_specs,
            out_specs=out_spec,
            compiler_params=pltpu.CompilerParams(
                dimension_semantics=("parallel",),
                vmem_limit_bytes=vmem_limit,
            ),
        )(*flat_inputs)

        return out_flat.reshape(b, s, out_dim)


if __name__ == "__main__":
    key = jax.random.PRNGKey(0)

    # Case 1: the original spec-style narrow-feature case (out_dim = 96 < 128)
    # -> takes the documented XLA-concat fallback path.
    batch1, seq1 = 2, 8
    dims1 = [16, 32, 48]
    keys1 = jax.random.split(key, len(dims1))
    inputs1 = [
        jax.random.normal(k, (batch1, seq1, fd), dtype=jnp.float32)
        for k, fd in zip(keys1, dims1)
    ]
    fusion1 = ConcatFusion(dims1)
    out1 = jax.block_until_ready(fusion1(inputs1))
    ref1 = jnp.concatenate(inputs1, axis=-1)
    assert out1.shape == (batch1, seq1, fusion1.output_dim)
    assert jnp.array_equal(out1, ref1)

    # Case 2: lane-dense feature dims -> exercises the Pallas tiled kernel
    # (rows = 128 -> multiple grid steps with an 8-row-aligned tile).
    batch2, seq2 = 2, 64
    dims2 = [128, 256, 128]
    keys2 = jax.random.split(jax.random.PRNGKey(1), len(dims2))
    inputs2 = [
        jax.random.normal(k, (batch2, seq2, fd), dtype=jnp.float32)
        for k, fd in zip(keys2, dims2)
    ]
    fusion2 = ConcatFusion(dims2)
    out2 = jax.block_until_ready(fusion2(inputs2))
    ref2 = jnp.concatenate(inputs2, axis=-1)
    assert out2.shape == (batch2, seq2, fusion2.output_dim)
    assert jnp.array_equal(out2, ref2)

    # Case 3: uneven row count (rows = 99) -> exercises the partial last
    # row-block handling of the Pallas pipeline.
    batch3, seq3 = 3, 33
    dims3 = [128, 128]
    keys3 = jax.random.split(jax.random.PRNGKey(2), len(dims3))
    inputs3 = [
        jax.random.normal(k, (batch3, seq3, fd), dtype=jnp.float32)
        for k, fd in zip(keys3, dims3)
    ]
    fusion3 = ConcatFusion(dims3)
    out3 = jax.block_until_ready(fusion3(inputs3))
    ref3 = jnp.concatenate(inputs3, axis=-1)
    assert out3.shape == (batch3, seq3, fusion3.output_dim)
    assert jnp.array_equal(out3, ref3)

    print("KERNEL_OK")
</pallas_src>

<mosaic_0001>
module attributes {stable_mosaic.version = 11 : i64} {
  func.func @kernel(%arg0: i32, %arg1: memref<16x128xf32, #tpu.memory_space<vmem>>, %arg2: memref<16x256xf32, #tpu.memory_space<vmem>>, %arg3: memref<16x128xf32, #tpu.memory_space<vmem>>, %arg4: memref<16x512xf32, #tpu.memory_space<vmem>>) attributes {dimension_semantics = [#tpu.dimension_semantics<parallel>], iteration_bounds = array<i64: 8>, scalar_prefetch = 0 : i64, scratch_operands = 0 : i64, tpu.core_type = #tpu.core_type<tc>, window_params = [{transform_indices = @transform_0, window_bounds = array<i64: 16, 128>}, {transform_indices = @transform_1, window_bounds = array<i64: 16, 256>}, {transform_indices = @transform_2, window_bounds = array<i64: 16, 128>}, {transform_indices = @transform_3, window_bounds = array<i64: 16, 512>}]} {
    %c0 = arith.constant 0 : index
    %c0_0 = arith.constant 0 : index
    %0 = vector.load %arg1[%c0, %c0_0] : memref<16x128xf32, #tpu.memory_space<vmem>>, vector<16x128xf32>
    %c0_1 = arith.constant 0 : index
    %c0_2 = arith.constant 0 : index
    %1 = vector.load %arg4[%c0_1, %c0_2] : memref<16x512xf32, #tpu.memory_space<vmem>>, vector<16x128xf32>
    tpu.vector_store %arg4[%c0_1, %c0_2], %0 {strides = array<i32>} : memref<16x512xf32, #tpu.memory_space<vmem>>, vector<16x128xf32>,
    %c0_3 = arith.constant 0 : index
    %c0_4 = arith.constant 0 : index
    %2 = vector.load %arg2[%c0_3, %c0_4] : memref<16x256xf32, #tpu.memory_space<vmem>>, vector<16x256xf32>
    %c0_5 = arith.constant 0 : index
    %c128 = arith.constant 128 : index
    %3 = vector.load %arg4[%c0_5, %c128] : memref<16x512xf32, #tpu.memory_space<vmem>>, vector<16x256xf32>
    tpu.vector_store %arg4[%c0_5, %c128], %2 {strides = array<i32>} : memref<16x512xf32, #tpu.memory_space<vmem>>, vector<16x256xf32>,
    %c0_6 = arith.constant 0 : index
    %c0_7 = arith.constant 0 : index
    %4 = vector.load %arg3[%c0_6, %c0_7] : memref<16x128xf32, #tpu.memory_space<vmem>>, vector<16x128xf32>
    %c0_8 = arith.constant 0 : index
    %c384 = arith.constant 384 : index
    %5 = vector.load %arg4[%c0_8, %c384] : memref<16x512xf32, #tpu.memory_space<vmem>>, vector<16x128xf32>
    tpu.vector_store %arg4[%c0_8, %c384], %4 {strides = array<i32>} : memref<16x512xf32, #tpu.memory_space<vmem>>, vector<16x128xf32>,
    return
  }
  func.func @transform_0(%arg0: i32) -> (i32, i32) {
    %c0_i32 = arith.constant 0 : i32
    %c0_i32_0 = arith.constant 0 : i32
    return %arg0, %c0_i32 : i32, i32
  }
  func.func @transform_1(%arg0: i32) -> (i32, i32) {
    %c0_i32 = arith.constant 0 : i32
    %c0_i32_0 = arith.constant 0 : i32
    return %arg0, %c0_i32 : i32, i32
  }
  func.func @transform_2(%arg0: i32) -> (i32, i32) {
    %c0_i32 = arith.constant 0 : i32
    %c0_i32_0 = arith.constant 0 : i32
    return %arg0, %c0_i32 : i32, i32
  }
  func.func @transform_3(%arg0: i32) -> (i32, i32) {
    %c0_i32 = arith.constant 0 : i32
    %c0_i32_0 = arith.constant 0 : i32
    return %arg0, %c0_i32 : i32, i32
  }
}

</mosaic_0001>

<llo_original>
// kernel: tpu_custom_call.1
$region0: #{tpu_custom_call.1}
  #allocation0 [shape = 'u32[]', space=smem, size = 0x4, offset = 0x4, fixed_abs, tag = 'smem constant byte address 0x4 - core index']
  #allocation1 [shape = 'u32[144,128]{1,0:T(1,128)}', space=vmem, size = 0x12000, scoped, tag = 'internal scratch']
  %s0 = inlined_call_operand.hbm [shape: f32[128,128], index: 0, kind: input, shape index: {}]
  %s1 = inlined_call_operand.hbm [shape: f32[128,256], index: 1, kind: input, shape index: {}]
  %s2 = inlined_call_operand.hbm [shape: f32[128,128], index: 2, kind: input, shape index: {}]
  %s3 = inlined_call_operand.hbm [shape: f32[128,512], index: 3, kind: output, shape index: {}]
  %s4 = sld [smem:[#allocation0]]
  $region57: #{tpu_custom_call.1} parent=0
    _
  %s6 = ssub.s32 1, %s4
  %s7 = scalar_select 0, %s6, %s4
  $region1: #{tpu_custom_call.1} parent=0
    #allocation2 [shape = 'u8[16384]{0}', space=vmem, size = 0x4000, scoped, tag = 'input window, operand 0']
    #allocation3 [shape = 's32[2]{0}', space=sflag, size = 0x8, scoped, tag = 'scoped memory for tpu_custom_call.1']
    #allocation4 [shape = 's32[2]{0}', space=sflag, size = 0x8, scoped, tag = 'scoped memory for tpu_custom_call.1']
    #allocation5 [shape = 'u8[32768]{0}', space=vmem, size = 0x8000, scoped, tag = 'input window, operand 1']
    #allocation6 [shape = 's32[2]{0}', space=sflag, size = 0x8, scoped, tag = 'scoped memory for tpu_custom_call.1']
    #allocation7 [shape = 'u8[16384]{0}', space=vmem, size = 0x4000, scoped, tag = 'input window, operand 2']
    #allocation8 [shape = 'u8[65536]{0}', space=vmem, size = 0x10000, scoped, tag = 'output window, operand 0']
    %8 = vsyncpa [#allocation3], 0
    %s9 = scalar_lea.sflag [#allocation3], 1
    %10 = vsyncpa %s9, 0
    %11 = vsyncpa [#allocation6], 0
    %s12 = scalar_lea.sflag [#allocation6], 1
    %13 = vsyncpa %s12, 0
    %14 = vsyncpa [#allocation4], 0
    %s15 = scalar_lea.sflag [#allocation4], 1
    %16 = vsyncpa %s15, 0
    loop: start=0, step=1, limit=10
    $region2: #{tpu_custom_call.1} parent=1 // loop_pre_header
      _
    $region3: #{tpu_custom_call.1} parent=1 // loop_header
      %s18 = sphi 0, %s22
      %p19 = scmp.ge.s32.totalorder %s18, 10
      %s28 = sphi 0, %s30
      %s31 = sphi 0, %s28
      %s32 = sphi 0, %s31
      %s48 = sphi 0, %s32
      %s54 = sphi 0, %s56
      %s57 = sphi 0, %s54
      %s58 = sphi 0, %s57
      %s74 = sphi 0, %s58
      %s80 = sphi 0, %s82
      %s83 = sphi 0, %s80
      %s84 = sphi 0, %s83
      %s100 = sphi 0, %s84
      %s106 = sphi 0, %s108
      %s109 = sphi 0, %s106
      %s110 = sphi 0, %s109
      %s126 = sphi 0, %s110
    $region4: #{tpu_custom_call.1} parent=1 // loop_header_branch
      %21 = sbr.rel (%p19) target = $region8
    $region5: #{tpu_custom_call.1} parent=1 // loop_body
      %s23 = ssub.s32 %s18, 1
      %s24 = ssub.s32 %s18, 2
      %s25 = sadd.s32 %s18, 1
      %s26 = ssub.s32 %s18, %s25
      %p27 = scmp.eq.s32.totalorder %s26, 0
      %s29 = sadd.s32 %s28, 1
      %s30 = scalar_select %p27, %s28, %s29
      %p33 = pneg %p27
      %p34 = scmp.eq.s32.totalorder %s18, 7
      %p35 = por %p33, %p34
      %p36 = scmp.ne.s32.totalorder %s28, %s31
      %p37 = scmp.eq.s32.totalorder %s18, 0
      %p38 = por %p36, %p37
      %p39 = scmp.ne.s32.totalorder %s28, %s31
      %p40 = scmp.eq.s32.totalorder %s23, 7
      %p41 = por %p39, %p40
      %p42 = scmp.ne.s32.totalorder %s31, %s32
      %p43 = scmp.eq.s32.totalorder %s23, 0
      %p44 = por %p42, %p43
      %p45 = scmp.ne.s32.totalorder %s31, %s32
      %p46 = scmp.eq.s32.totalorder %s24, 7
      %p47 = por %p45, %p46
      %p49 = scmp.ne.s32.totalorder %s32, %s48
      %p50 = scmp.eq.s32.totalorder %s24, 0
      %p51 = por %p49, %p50
      %s52 = ssub.s32 %s18, %s25
      %p53 = scmp.eq.s32.totalorder %s52, 0
      %s55 = sadd.s32 %s54, 1
      %s56 = scalar_select %p53, %s54, %s55
      %p59 = pneg %p53
      %p60 = scmp.eq.s32.totalorder %s18, 7
      %p61 = por %p59, %p60
      %p62 = scmp.ne.s32.totalorder %s54, %s57
      %p63 = scmp.eq.s32.totalorder %s18, 0
      %p64 = por %p62, %p63
      %p65 = scmp.ne.s32.totalorder %s54, %s57
      %p66 = scmp.eq.s32.totalorder %s23, 7
      %p67 = por %p65, %p66
      %p68 = scmp.ne.s32.totalorder %s57, %s58
      %p69 = scmp.eq.s32.totalorder %s23, 0
      %p70 = por %p68, %p69
      %p71 = scmp.ne.s32.totalorder %s57, %s58
      %p72 = scmp.eq.s32.totalorder %s24, 7
      %p73 = por %p71, %p72
      %p75 = scmp.ne.s32.totalorder %s58, %s74
      %p76 = scmp.eq.s32.totalorder %s24, 0
      %p77 = por %p75, %p76
      %s78 = ssub.s32 %s18, %s25
      %p79 = scmp.eq.s32.totalorder %s78, 0
      %s81 = sadd.s32 %s80, 1
      %s82 = scalar_select %p79, %s80, %s81
      %p85 = pneg %p79
      %p86 = scmp.eq.s32.totalorder %s18, 7
      %p87 = por %p85, %p86
      %p88 = scmp.ne.s32.totalorder %s80, %s83
      %p89 = scmp.eq.s32.totalorder %s18, 0
      %p90 = por %p88, %p89
      %p91 = scmp.ne.s32.totalorder %s80, %s83
      %p92 = scmp.eq.s32.totalorder %s23, 7
      %p93 = por %p91, %p92
      %p94 = scmp.ne.s32.totalorder %s83, %s84
      %p95 = scmp.eq.s32.totalorder %s23, 0
      %p96 = por %p94, %p95
      %p97 = scmp.ne.s32.totalorder %s83, %s84
      %p98 = scmp.eq.s32.totalorder %s24, 7
      %p99 = por %p97, %p98
      %p101 = scmp.ne.s32.totalorder %s84, %s100
      %p102 = scmp.eq.s32.totalorder %s24, 0
      %p103 = por %p101, %p102
      %s104 = ssub.s32 %s18, %s25
      %p105 = scmp.eq.s32.totalorder %s104, 0
      %s107 = sadd.s32 %s106, 1
      %s108 = scalar_select %p105, %s106, %s107
      %p111 = pneg %p105
      %p112 = scmp.eq.s32.totalorder %s18, 7
      %p113 = por %p111, %p112
      %p114 = scmp.ne.s32.totalorder %s106, %s109
      %p115 = scmp.eq.s32.totalorder %s18, 0
      %p116 = por %p114, %p115
      %p117 = scmp.ne.s32.totalorder %s106, %s109
      %p118 = scmp.eq.s32.totalorder %s23, 7
      %p119 = por %p117, %p118
      %p120 = scmp.ne.s32.totalorder %s109, %s110
      %p121 = scmp.eq.s32.totalorder %s23, 0
      %p122 = por %p120, %p121
      %p123 = scmp.ne.s32.totalorder %s109, %s110
      %p124 = scmp.eq.s32.totalorder %s24, 7
      %p125 = por %p123, %p124
      %p127 = scmp.ne.s32.totalorder %s110, %s126
      %p128 = scmp.eq.s32.totalorder %s24, 0
      %p129 = por %p127, %p128
      %p130 = scmp.le.s32.totalorder 1, %s18
      %p131 = scmp.lt.s32.totalorder %s18, 9
      %p132 = pnand %p130, %p131
      %p133 = pneg %p132
      // Predicated region
      $region9: #{tpu_custom_call.1} parent=5 // pred_check
        _
      $region10: #{tpu_custom_call.1} parent=5 // pred_check_branch
        %135 = sbr.rel (%p132) target = $region12
      $region11: #{tpu_custom_call.1} parent=5 // pred_region
        %s136 = ssub.s32 %s18, 1
      $region12: #{tpu_custom_call.1} parent=5 // pred_fallthru
        _
      %p137 = scmp.lt.s32.totalorder %s18, 8
      // Predicated region
      $region13: #{tpu_custom_call.1} parent=5 // pred_check
        %p138 = pneg %p137
      $region14: #{tpu_custom_call.1} parent=5 // pred_check_branch
        %140 = sbr.rel (%p138) target = $region16
      $region15: #{tpu_custom_call.1} parent=5 // pred_region
        // Predicated region
        $region17: #{tpu_custom_call.1} parent=15 // pred_check
          %p141 = pneg %p38
        $region18: #{tpu_custom_call.1} parent=15 // pred_check_branch
          %143 = sbr.rel (%p141) target = $region20
        $region19: #{tpu_custom_call.1} parent=15 // pred_region
          %s144 = sand.u32 %s28, 1
          %s145 = scalar_lea.sflag [#allocation3], %s144
          %s146 = sand.u32 %s28, 1
          %s147 = smul.addr %s146, 16
          %s148 = scalar_lea.vmem [#allocation2], %s147
          %s149 = smul.u32 2, %s18
          %s151 = ssub.s32 256, 256
          %152 = vsyncadd %s145, %s151
          %s153 = smul.addr %s149, 128
          %s154 = scalar_lea.hbm %s0, %s153
          %s155 = sshll.u32 %s148, 4
          %s156 = int_to_ptr.vmem [resolvable:$true] %s155
          %161 = dma.hbm_to_vmem [thread:$0]  %s154, 256, %s156, %s145, 128, 128, 8
        $region20: #{tpu_custom_call.1} parent=15 // pred_fallthru
          _
        // Predicated region
        $region21: #{tpu_custom_call.1} parent=15 // pred_check
          %p162 = pneg %p64
        $region22: #{tpu_custom_call.1} parent=15 // pred_check_branch
          %164 = sbr.rel (%p162) target = $region24
        $region23: #{tpu_custom_call.1} parent=15 // pred_region
          %s165 = sand.u32 %s18, 1
          %s166 = scalar_lea.sflag [#allocation6], %s165
          %s167 = sand.u32 %s54, 1
          %s168 = smul.addr %s167, 32
          %s169 = scalar_lea.vmem [#allocation5], %s168
          %s170 = smul.u32 2, %s18
          %s172 = ssub.s32 512, 512
          %173 = vsyncadd %s166, %s172
          %s174 = smul.addr %s170, 2
          %s175 = smul.addr %s174, 128
          %s176 = scalar_lea.hbm %s1, %s175
          %s177 = sshll.u32 %s169, 4
          %s178 = int_to_ptr.vmem [resolvable:$true] %s177
          %183 = dma.hbm_to_vmem [thread:$0]  %s176, 512, %s178, %s166, 256, 256, 16
        $region24: #{tpu_custom_call.1} parent=15 // pred_fallthru
          _
        // Predicated region
        $region25: #{tpu_custom_call.1} parent=15 // pred_check
          %p184 = pneg %p90
        $region26: #{tpu_custom_call.1} parent=15 // pred_check_branch
          %186 = sbr.rel (%p184) target = $region28
        $region27: #{tpu_custom_call.1} parent=15 // pred_region
          %s187 = sand.u32 %s18, 1
          %s188 = scalar_lea.sflag [#allocation6], %s187
          %s189 = sand.u32 %s80, 1
          %s190 = smul.addr %s189, 16
          %s191 = scalar_lea.vmem [#allocation7], %s190
          %s192 = smul.u32 2, %s18
          %s194 = ssub.s32 256, 256
          %195 = vsyncadd %s188, %s194
          %s196 = smul.addr %s192, 128
          %s197 = scalar_lea.hbm %s2, %s196
          %s198 = sshll.u32 %s191, 4
          %s199 = int_to_ptr.vmem [resolvable:$true] %s198
          %204 = dma.hbm_to_vmem [thread:$0]  %s197, 256, %s199, %s188, 128, 128, 8
        $region28: #{tpu_custom_call.1} parent=15 // pred_fallthru
          _
      $region16: #{tpu_custom_call.1} parent=5 // pred_fallthru
        _
      %p205 = scmp.le.s32.totalorder 1, %s18
      %p206 = scmp.lt.s32.totalorder %s18, 9
      %p207 = pnand %p205, %p206
      %p208 = pneg %p207
      // Predicated region
      $region29: #{tpu_custom_call.1} parent=5 // pred_check
        _
      $region30: #{tpu_custom_call.1} parent=5 // pred_check_branch
        %210 = sbr.rel (%p207) target = $region32
      $region31: #{tpu_custom_call.1} parent=5 // pred_region
        %s211 = ssub.s32 %s18, 1
        %s212 = sand.u32 %s31, 1
        %s213 = scalar_lea.sflag [#allocation3], %s212
        %s214 = sand.u32 %s31, 1
        %s215 = smul.addr %s214, 16
        %s216 = scalar_lea.vmem [#allocation2], %s215
        // Predicated region
        $region33: #{tpu_custom_call.1} parent=31 // pred_check
          %p217 = pneg %p44
        $region34: #{tpu_custom_call.1} parent=31 // pred_check_branch
          %219 = sbr.rel (%p217) target = $region36
        $region35: #{tpu_custom_call.1} parent=31 // pred_region
          %220 = dma.done %s213, 256
        $region36: #{tpu_custom_call.1} parent=31 // pred_fallthru
          _
        %s221 = sand.u32 %s23, 1
        %s222 = scalar_lea.sflag [#allocation6], %s221
        %s223 = sand.u32 %s57, 1
        %s224 = smul.addr %s223, 32
        %s225 = scalar_lea.vmem [#allocation5], %s224
        // Predicated region
        $region37: #{tpu_custom_call.1} parent=31 // pred_check
          %p226 = pneg %p70
        $region38: #{tpu_custom_call.1} parent=31 // pred_check_branch
          %228 = sbr.rel (%p226) target = $region40
        $region39: #{tpu_custom_call.1} parent=31 // pred_region
          %229 = dma.done %s222, 512
        $region40: #{tpu_custom_call.1} parent=31 // pred_fallthru
          _
        %s230 = sand.u32 %s23, 1
        %s231 = scalar_lea.sflag [#allocation6], %s230
        %s232 = sand.u32 %s83, 1
        %s233 = smul.addr %s232, 16
        %s234 = scalar_lea.vmem [#allocation7], %s233
        // Predicated region
        $region41: #{tpu_custom_call.1} parent=31 // pred_check
          %p235 = pneg %p96
        $region42: #{tpu_custom_call.1} parent=31 // pred_check_branch
          %237 = sbr.rel (%p235) target = $region44
        $region43: #{tpu_custom_call.1} parent=31 // pred_region
          %238 = dma.done %s231, 256
        $region44: #{tpu_custom_call.1} parent=31 // pred_fallthru
          _
        %s239 = sand.u32 %s31, 1
        %s240 = scalar_lea.sflag [#allocation3], %s239
        %s241 = sand.u32 %s31, 1
        %s242 = smul.addr %s241, 16
        %s243 = scalar_lea.vmem [#allocation2], %s242
        %p244 = pneg %p44
        %p245 = pneg %p41
        %s246 = sand.u32 %s23, 1
        %s247 = scalar_lea.sflag [#allocation6], %s246
        %s248 = sand.u32 %s57, 1
        %s249 = smul.addr %s248, 32
        %s250 = scalar_lea.vmem [#allocation5], %s249
        %p251 = pneg %p70
        %p252 = pneg %p67
        %s253 = sand.u32 %s23, 1
        %s254 = scalar_lea.sflag [#allocation6], %s253
        %s255 = sand.u32 %s83, 1
        %s256 = smul.addr %s255, 16
        %s257 = scalar_lea.vmem [#allocation7], %s256
        %p258 = pneg %p96
        %p259 = pneg %p93
        %p260 = pneg %p122
        %p261 = pneg %p119
        %s262 = sand.u32 %s109, 1
        %s263 = scalar_lea.sflag [#allocation4], %s262
        %s264 = sand.u32 %s109, 1
        %s265 = smul.addr %s264, 64
        %s266 = scalar_lea.vmem [#allocation8], %s265
        %s267 = smul.u32 2, %s23
        %s268 = smul.u32 2, %s23
        %s269 = smul.u32 2, %s23
        %s270 = smul.u32 2, %s23
        %v271 = vld [vmem:[%s216] sm:$0xff]
        %v272 = vld [vmem:[%s216 + $0x8] sm:$0xff]
        %273 = vst [vmem:[%s266] sm:$0xff] %v271
        %274 = vst [vmem:[%s266 + $0x20] sm:$0xff] %v272
        %v275 = vld [vmem:[%s225] sm:$0xff]
        %v276 = vld [vmem:[%s225 + $0x8] sm:$0xff]
        %v277 = vld [vmem:[%s225 + $0x10] sm:$0xff]
        %v278 = vld [vmem:[%s225 + $0x18] sm:$0xff]
        %279 = vst [vmem:[%s266 + $0x8] sm:$0xff] %v275
        %280 = vst [vmem:[%s266 + $0x10] sm:$0xff] %v276
        %281 = vst [vmem:[%s266 + $0x28] sm:$0xff] %v277
        %282 = vst [vmem:[%s266 + $0x30] sm:$0xff] %v278
        %v283 = vld [vmem:[%s234] sm:$0xff]
        %v284 = vld [vmem:[%s234 + $0x8] sm:$0xff]
        %285 = vst [vmem:[%s266 + $0x18] sm:$0xff] %v283
        %286 = vst [vmem:[%s266 + $0x38] sm:$0xff] %v284
        %s287 = sand.u32 %s109, 1
        %s288 = scalar_lea.sflag [#allocation4], %s287
        %s289 = sand.u32 %s109, 1
        %s290 = smul.addr %s289, 64
        %s291 = scalar_lea.vmem [#allocation8], %s290
        // Predicated region
        $region45: #{tpu_custom_call.1} parent=31 // pred_check
          %p292 = pneg %p119
        $region46: #{tpu_custom_call.1} parent=31 // pred_check_branch
          %294 = sbr.rel (%p292) target = $region48
        $region47: #{tpu_custom_call.1} parent=31 // pred_region
          %s295 = smul.u32 2, %s23
          %s297 = ssub.s32 1024, 1024
          %298 = vsyncadd %s288, %s297
          %s299 = smul.addr %s295, 4
          %s300 = smul.addr %s299, 128
          %s301 = scalar_lea.hbm %s3, %s300
          %s302 = sshll.u32 %s291, 4
          %s303 = int_to_ptr.vmem [resolvable:$true] %s302
          %308 = dma.vmem_to_hbm [thread:$0]  %s303, 1024, %s301, %s288, 512, 512, 32
        $region48: #{tpu_custom_call.1} parent=31 // pred_fallthru
          _
      $region32: #{tpu_custom_call.1} parent=5 // pred_fallthru
        _
      %p309 = scmp.le.s32.totalorder 2, %s18
      // Predicated region
      $region49: #{tpu_custom_call.1} parent=5 // pred_check
        %p310 = pneg %p309
      $region50: #{tpu_custom_call.1} parent=5 // pred_check_branch
        %312 = sbr.rel (%p310) target = $region52
      $region51: #{tpu_custom_call.1} parent=5 // pred_region
        %s313 = ssub.s32 %s18, 2
        // Predicated region
        $region53: #{tpu_custom_call.1} parent=51 // pred_check
          %p314 = pneg %p125
        $region54: #{tpu_custom_call.1} parent=51 // pred_check_branch
          %316 = sbr.rel (%p314) target = $region56
        $region55: #{tpu_custom_call.1} parent=51 // pred_region
          %s317 = sand.u32 %s110, 1
          %s318 = scalar_lea.sflag [#allocation4], %s317
          %s319 = sand.u32 %s110, 1
          %s320 = smul.addr %s319, 64
          %s321 = scalar_lea.vmem [#allocation8], %s320
          %322 = dma.done %s318, 1024
        $region56: #{tpu_custom_call.1} parent=51 // pred_fallthru
          _
      $region52: #{tpu_custom_call.1} parent=5 // pred_fallthru
        _
    $region6: #{tpu_custom_call.1} parent=1 // loop_footer
      %s22 = sadd.s32 1, %s18
    $region7: #{tpu_custom_call.1} parent=1 // loop_footer_branch
      %17 = sbr.rel target = $region3
    $region8: #{tpu_custom_call.1} parent=1 // loop_exit
      _
    %323 = vsyncpa [#allocation3], 1
    %s324 = scalar_lea.sflag [#allocation3], 1
    %325 = vsyncpa %s324, 1
    %326 = vsyncpa [#allocation6], 1
    %s327 = scalar_lea.sflag [#allocation6], 1
    %328 = vsyncpa %s327, 1
    %329 = vsyncpa [#allocation4], 1
    %s330 = scalar_lea.sflag [#allocation4], 1
    %331 = vsyncpa %s330, 1

</llo_original>
